<compile_context>
chip_gen: v5e
topology: v5e:2x2
jax: 0.10.0
libtpu: 0.0.40
codegen_flags: <defaults>
</compile_context>

<pallas_src>
import functools

import jax
import jax.numpy as jnp
from jax.experimental import pallas as pl
from jax.experimental.pallas import tpu as pltpu


def _conv1x1_kernel(x_ref, w_ref, b_ref, o_ref):
    # x_ref: (tm, Cin), w_ref: (Cin, Cout) resident, b_ref: (1, Cout) resident,
    # o_ref: (tm, Cout).  Plain K-contraction -> no in-kernel weight transpose.
    acc = jnp.dot(x_ref[...], w_ref[...], preferred_element_type=jnp.float32)
    o_ref[...] = (acc + b_ref[...]).astype(o_ref.dtype)


@functools.lru_cache(maxsize=None)
def _vmem_capacity_bytes():
    """Physical VMEM of the attached TPU generation (fallback: v7x 64 MiB)."""
    try:
        return int(pltpu.get_tpu_info().vmem_capacity_bytes)
    except Exception:  # pragma: no cover - conservative fallback
        return 64 * 1024 * 1024


def _pick_tile_m(M, Cin, Cout, dtype_bytes=4):
    """Largest row tile whose double-buffered tiles fit the VMEM budget.

    Counts double buffers for the streamed x / out tiles AND for the
    grid-resident weight/bias blocks (the pipeline still allocates two buffers
    for them), and never returns a tile larger than M.
    """
    if M <= 1024:
        return M  # block_shape == full array dim is always legal

    capacity = _vmem_capacity_bytes()
    budget = int(capacity * 0.6)  # headroom for compiler-internal scratch

    def usage(t):
        streamed = 2 * t * (Cin + Cout)          # x tile + out tile, double-buffered
        resident = 2 * (Cin * Cout + Cout)       # weight + bias, also double-buffered
        return (streamed + resident) * dtype_bytes

    tm = 4096
    while tm > 8 and usage(tm) > budget:
        tm //= 2
    return min(tm, M)


def prepare_conv1x1_params(weight, bias):
    """One-time parameter prep (hoisted out of the per-call path).

    weight: [Cout, Cin, 1, 1] (PyTorch layout) -> (Cin, Cout) pre-transposed.
    bias:   [Cout]                              -> (1, Cout).
    """
    Cout, Cin = weight.shape[0], weight.shape[1]
    w_t = jnp.asarray(weight).reshape(Cout, Cin).T   # (Cin, Cout), materialized once
    b2d = jnp.asarray(bias).reshape(1, Cout)
    return w_t, b2d


@jax.jit
def conv2d_1x1(x_nchw, w_t, b2d):
    """1x1 stride-1 Conv2d forward, equivalent to torch.nn.Conv2d(Cin, Cout, 1).

    x_nchw: [N, Cin, H, W]; w_t: [Cin, Cout] (pre-transposed); b2d: [1, Cout]
    returns [N, Cout, H, W]
    """
    N, Cin, H, W = x_nchw.shape
    Cout = w_t.shape[1]
    M = N * H * W

    # For H == W == 1 this "transpose" is a pure reshape (no data movement).
    # TODO(synk): for H*W >= 128 add a native-NCHW per-batch
    # out[Cout, HW_tile] = w^T @ x[Cin, HW_tile] variant to avoid the two
    # NCHW<->NHWC HBM passes on real feature maps.
    x2d = jnp.transpose(x_nchw, (0, 2, 3, 1)).reshape(M, Cin)

    tm = _pick_tile_m(M, Cin, Cout)
    grid = (pl.cdiv(M, tm),)

    capacity = _vmem_capacity_bytes()
    vmem_limit = min(int(capacity * 0.75), capacity - (8 << 20))

    cost = pl.CostEstimate(
        flops=2 * M * Cin * Cout,
        transcendentals=0,
        bytes_accessed=4 * (M * Cin + Cin * Cout + Cout + M * Cout),
    )

    out2d = pl.pallas_call(
        _conv1x1_kernel,
        out_shape=jax.ShapeDtypeStruct((M, Cout), x_nchw.dtype),
        grid_spec=pltpu.PrefetchScalarGridSpec(
            num_scalar_prefetch=0,
            grid=grid,
            in_specs=[
                pl.BlockSpec((tm, Cin), lambda i: (i, 0)),    # streamed row tiles
                pl.BlockSpec((Cin, Cout), lambda i: (0, 0)),  # VMEM-resident weight
                pl.BlockSpec((1, Cout), lambda i: (0, 0)),    # VMEM-resident bias
            ],
            out_specs=pl.BlockSpec((tm, Cout), lambda i: (i, 0)),
        ),
        compiler_params=pltpu.CompilerParams(
            dimension_semantics=("parallel",),  # row tiles shard across TCs
            vmem_limit_bytes=vmem_limit,
        ),
        cost_estimate=cost,
    )(x2d, w_t, b2d)

    # No padding was introduced, so no slice pass: just restore NCHW.
    return jnp.transpose(out2d.reshape(N, H, W, Cout), (0, 3, 1, 2))


if __name__ == "__main__":
    key = jax.random.PRNGKey(0)
    kx, kw, kb = jax.random.split(key, 3)

    # Shapes fixed by the module: Conv2d(2304, 96, 1) applied to [1, 2304, 1, 1].
    N, Cin, Cout, H, W = 1, 2304, 96, 1, 1

    x726 = jax.random.normal(kx, (N, Cin, H, W), dtype=jnp.float32)
    weight = jax.random.normal(kw, (Cout, Cin, 1, 1), dtype=jnp.float32) * 0.02
    bias = jax.random.normal(kb, (Cout,), dtype=jnp.float32) * 0.02

    # One-time parameter prep (module init), outside the per-call jit path.
    w_t, b2d = prepare_conv1x1_params(weight, bias)
    jax.block_until_ready((w_t, b2d))

    x727 = conv2d_1x1(x726, w_t, b2d)
    jax.block_until_ready(x727)

    # Sanity check against plain-JAX reference.
    ref = (
        jnp.einsum("nchw,oc->nohw", x726, weight.reshape(Cout, Cin))
        + bias.reshape(1, Cout, 1, 1)
    )
    assert x727.shape == (N, Cout, H, W)
    assert jnp.allclose(x727, ref, atol=1e-4, rtol=1e-4)

    print("KERNEL_OK")
</pallas_src>

<mosaic_0001>
module attributes {stable_mosaic.version = 11 : i64} {
  func.func @_conv1x1_kernel(%arg0: i32, %arg1: memref<1x2304xf32, #tpu.memory_space<vmem>>, %arg2: memref<2304x96xf32, #tpu.memory_space<vmem>>, %arg3: memref<1x96xf32, #tpu.memory_space<vmem>>, %arg4: memref<1x96xf32, #tpu.memory_space<vmem>>) attributes {dimension_semantics = [#tpu.dimension_semantics<parallel>], iteration_bounds = array<i64: 1>, scalar_prefetch = 0 : i64, scratch_operands = 0 : i64, tpu.core_type = #tpu.core_type<tc>, window_params = [{transform_indices = @transform_0, window_bounds = array<i64: 1, 2304>}, {pipeline_mode = #tpu.pipeline_mode<synchronous>, transform_indices = @transform_1, window_bounds = array<i64: 2304, 96>}, {pipeline_mode = #tpu.pipeline_mode<synchronous>, transform_indices = @transform_2, window_bounds = array<i64: 1, 96>}, {transform_indices = @transform_3, window_bounds = array<i64: 1, 96>}]} {
    %c0 = arith.constant 0 : index
    %c0_0 = arith.constant 0 : index
    %0 = vector.load %arg1[%c0, %c0_0] : memref<1x2304xf32, #tpu.memory_space<vmem>>, vector<1x2304xf32>
    %c0_1 = arith.constant 0 : index
    %c0_2 = arith.constant 0 : index
    %1 = vector.load %arg2[%c0_1, %c0_2] : memref<2304x96xf32, #tpu.memory_space<vmem>>, vector<2304x96xf32>
    %cst = arith.constant dense<0.000000e+00> : vector<1x96xf32>
    %2 = tpu.matmul %0, %1, %cst {dimension_numbers = #tpu.dot_dimension_numbers<[1], [0], [0], [1], [0, 0, 1, 1], [], []>} : vector<1x2304xf32>, vector<2304x96xf32>, vector<1x96xf32> -> vector<1x96xf32>
    %c0_3 = arith.constant 0 : index
    %c0_4 = arith.constant 0 : index
    %3 = vector.load %arg3[%c0_3, %c0_4] : memref<1x96xf32, #tpu.memory_space<vmem>>, vector<1x96xf32>
    %4 = arith.addf %2, %3 : vector<1x96xf32>
    %c0_5 = arith.constant 0 : index
    %c0_6 = arith.constant 0 : index
    %5 = vector.load %arg4[%c0_5, %c0_6] : memref<1x96xf32, #tpu.memory_space<vmem>>, vector<1x96xf32>
    tpu.vector_store %arg4[%c0_5, %c0_6], %4 {strides = array<i32>} : memref<1x96xf32, #tpu.memory_space<vmem>>, vector<1x96xf32>,
    return
  }
  func.func @transform_0(%arg0: i32) -> (i32, i32) {
    %c0_i32 = arith.constant 0 : i32
    %c0_i32_0 = arith.constant 0 : i32
    return %arg0, %c0_i32 : i32, i32
  }
  func.func @transform_1(%arg0: i32) -> (i32, i32) {
    %c0_i32 = arith.constant 0 : i32
    %c0_i32_0 = arith.constant 0 : i32
    %c0_i32_1 = arith.constant 0 : i32
    return %c0_i32, %c0_i32_0 : i32, i32
  }
  func.func @transform_2(%arg0: i32) -> (i32, i32) {
    %c0_i32 = arith.constant 0 : i32
    %c0_i32_0 = arith.constant 0 : i32
    %c0_i32_1 = arith.constant 0 : i32
    return %c0_i32, %c0_i32_0 : i32, i32
  }
  func.func @transform_3(%arg0: i32) -> (i32, i32) {
    %c0_i32 = arith.constant 0 : i32
    %c0_i32_0 = arith.constant 0 : i32
    return %arg0, %c0_i32 : i32, i32
  }
}

</mosaic_0001>

<llo_original>
// kernel: conv2d_1x1.1
$region0: #{conv2d_1x1.1}
  #allocation0 [shape = 'u32[]', space=smem, size = 0x4, offset = 0x4, fixed_abs, tag = 'smem constant byte address 0x4 - core index']
  #allocation1 [shape = 'u32[72,128]{1,0:T(1,128)}', space=vmem, size = 0x9000, scoped, tag = 'internal scratch']
  %s0 = inlined_call_operand.vmem [shape: f32[1,2304], index: 0, kind: input, shape index: {}]
  %s1 = inlined_call_operand.vmem [shape: f32[2304,96], index: 1, kind: input, shape index: {}]
  %s2 = inlined_call_operand.vmem [shape: f32[1,96], index: 2, kind: input, shape index: {}]
  %s3 = inlined_call_operand.hbm [shape: f32[1,96], index: 3, kind: output, shape index: {}]
  %s4 = sld [smem:[#allocation0]]
  $region22: #{conv2d_1x1.1} parent=0
    _
  %s6 = ssub.s32 1, %s4
  %s7 = scalar_select 0, %s6, %s4
  $region1: #{conv2d_1x1.1} parent=0
    #allocation2 [shape = 'u8[512]{0}', space=vmem, size = 0x400, scoped, tag = 'output window, operand 0, single buffered']
    #allocation3 [shape = 's32[1]{0}', space=sflag, size = 0x4, scoped, tag = 'scoped memory for conv2d_1x1.1']
    %8 = vsyncpa [#allocation3], 0
    // Predicated region
    $region2: #{conv2d_1x1.1} parent=1 // pred_check
      _
    $region3: #{conv2d_1x1.1} parent=1 // pred_check_branch
      %10 = sbr.rel (0) target = $region5
    $region4: #{conv2d_1x1.1} parent=1 // pred_region
      _
    $region5: #{conv2d_1x1.1} parent=1 // pred_fallthru
      _
    // Predicated region
    $region6: #{conv2d_1x1.1} parent=1 // pred_check
      _
    $region7: #{conv2d_1x1.1} parent=1 // pred_check_branch
      %12 = sbr.rel (0) target = $region9
    $region8: #{conv2d_1x1.1} parent=1 // pred_region
      _
    $region9: #{conv2d_1x1.1} parent=1 // pred_fallthru
      _
    // Predicated region
    $region10: #{conv2d_1x1.1} parent=1 // pred_check
      _
    $region11: #{conv2d_1x1.1} parent=1 // pred_check_branch
      %14 = sbr.rel (0) target = $region13
    $region12: #{conv2d_1x1.1} parent=1 // pred_region
      _
    $region13: #{conv2d_1x1.1} parent=1 // pred_fallthru
      _
    %v15 = vld [vmem:[%s0] sm:$0xff]
    %v16 = vld [vmem:[%s0 + $0x8] sm:$0xff]
    %v17 = vld [vmem:[%s0 + $0x10] sm:$0x3]
    %v18 = vld [vmem:[%s1] sm:$0xff]
    %v19 = vld [vmem:[%s1 + $0x8] sm:$0xff]
    %v20 = vld [vmem:[%s1 + $0x10] sm:$0xff]
    %v21 = vld [vmem:[%s1 + $0x18] sm:$0xff]
    %v22 = vld [vmem:[%s1 + $0x20] sm:$0xff]
    %v23 = vld [vmem:[%s1 + $0x28] sm:$0xff]
    %v24 = vld [vmem:[%s1 + $0x30] sm:$0xff]
    %v25 = vld [vmem:[%s1 + $0x38] sm:$0xff]
    %v26 = vld [vmem:[%s1 + $0x40] sm:$0xff]
    %v27 = vld [vmem:[%s1 + $0x48] sm:$0xff]
    %v28 = vld [vmem:[%s1 + $0x50] sm:$0xff]
    %v29 = vld [vmem:[%s1 + $0x58] sm:$0xff]
    %v30 = vld [vmem:[%s1 + $0x60] sm:$0xff]
    %v31 = vld [vmem:[%s1 + $0x68] sm:$0xff]
    %v32 = vld [vmem:[%s1 + $0x70] sm:$0xff]
    %v33 = vld [vmem:[%s1 + $0x78] sm:$0xff]
    %v34 = vld [vmem:[%s1 + $0x80] sm:$0xff]
    %v35 = vld [vmem:[%s1 + $0x88] sm:$0xff]
    %v36 = vld [vmem:[%s1 + $0x90] sm:$0xff]
    %v37 = vld [vmem:[%s1 + $0x98] sm:$0xff]
    %v38 = vld [vmem:[%s1 + $0xa0] sm:$0xff]
    %v39 = vld [vmem:[%s1 + $0xa8] sm:$0xff]
    %v40 = vld [vmem:[%s1 + $0xb0] sm:$0xff]
    %v41 = vld [vmem:[%s1 + $0xb8] sm:$0xff]
    %v42 = vld [vmem:[%s1 + $0xc0] sm:$0xff]
    %v43 = vld [vmem:[%s1 + $0xc8] sm:$0xff]
    %v44 = vld [vmem:[%s1 + $0xd0] sm:$0xff]
    %v45 = vld [vmem:[%s1 + $0xd8] sm:$0xff]
    %v46 = vld [vmem:[%s1 + $0xe0] sm:$0xff]
    %v47 = vld [vmem:[%s1 + $0xe8] sm:$0xff]
    %v48 = vld [vmem:[%s1 + $0xf0] sm:$0xff]
    %v49 = vld [vmem:[%s1 + $0xf8] sm:$0xff]
    %v50 = vld [vmem:[%s1 + $0x100] sm:$0xff]
    %v51 = vld [vmem:[%s1 + $0x108] sm:$0xff]
    %v52 = vld [vmem:[%s1 + $0x110] sm:$0xff]
    %v53 = vld [vmem:[%s1 + $0x118] sm:$0xff]
    %v54 = vld [vmem:[%s1 + $0x120] sm:$0xff]
    %v55 = vld [vmem:[%s1 + $0x128] sm:$0xff]
    %v56 = vld [vmem:[%s1 + $0x130] sm:$0xff]
    %v57 = vld [vmem:[%s1 + $0x138] sm:$0xff]
    %v58 = vld [vmem:[%s1 + $0x140] sm:$0xff]
    %v59 = vld [vmem:[%s1 + $0x148] sm:$0xff]
    %v60 = vld [vmem:[%s1 + $0x150] sm:$0xff]
    %v61 = vld [vmem:[%s1 + $0x158] sm:$0xff]
    %v62 = vld [vmem:[%s1 + $0x160] sm:$0xff]
    %v63 = vld [vmem:[%s1 + $0x168] sm:$0xff]
    %v64 = vld [vmem:[%s1 + $0x170] sm:$0xff]
    %v65 = vld [vmem:[%s1 + $0x178] sm:$0xff]
    %v66 = vld [vmem:[%s1 + $0x180] sm:$0xff]
    %v67 = vld [vmem:[%s1 + $0x188] sm:$0xff]
    %v68 = vld [vmem:[%s1 + $0x190] sm:$0xff]
    %v69 = vld [vmem:[%s1 + $0x198] sm:$0xff]
    %v70 = vld [vmem:[%s1 + $0x1a0] sm:$0xff]
    %v71 = vld [vmem:[%s1 + $0x1a8] sm:$0xff]
    %v72 = vld [vmem:[%s1 + $0x1b0] sm:$0xff]
    %v73 = vld [vmem:[%s1 + $0x1b8] sm:$0xff]
    %v74 = vld [vmem:[%s1 + $0x1c0] sm:$0xff]
    %v75 = vld [vmem:[%s1 + $0x1c8] sm:$0xff]
    %v76 = vld [vmem:[%s1 + $0x1d0] sm:$0xff]
    %v77 = vld [vmem:[%s1 + $0x1d8] sm:$0xff]
    %v78 = vld [vmem:[%s1 + $0x1e0] sm:$0xff]
    %v79 = vld [vmem:[%s1 + $0x1e8] sm:$0xff]
    %v80 = vld [vmem:[%s1 + $0x1f0] sm:$0xff]
    %v81 = vld [vmem:[%s1 + $0x1f8] sm:$0xff]
    %v82 = vld [vmem:[%s1 + $0x200] sm:$0xff]
    %v83 = vld [vmem:[%s1 + $0x208] sm:$0xff]
    %v84 = vld [vmem:[%s1 + $0x210] sm:$0xff]
    %v85 = vld [vmem:[%s1 + $0x218] sm:$0xff]
    %v86 = vld [vmem:[%s1 + $0x220] sm:$0xff]
    %v87 = vld [vmem:[%s1 + $0x228] sm:$0xff]
    %v88 = vld [vmem:[%s1 + $0x230] sm:$0xff]
    %v89 = vld [vmem:[%s1 + $0x238] sm:$0xff]
    %v90 = vld [vmem:[%s1 + $0x240] sm:$0xff]
    %v91 = vld [vmem:[%s1 + $0x248] sm:$0xff]
    %v92 = vld [vmem:[%s1 + $0x250] sm:$0xff]
    %v93 = vld [vmem:[%s1 + $0x258] sm:$0xff]
    %v94 = vld [vmem:[%s1 + $0x260] sm:$0xff]
    %v95 = vld [vmem:[%s1 + $0x268] sm:$0xff]
    %v96 = vld [vmem:[%s1 + $0x270] sm:$0xff]
    %v97 = vld [vmem:[%s1 + $0x278] sm:$0xff]
    %v98 = vld [vmem:[%s1 + $0x280] sm:$0xff]
    %v99 = vld [vmem:[%s1 + $0x288] sm:$0xff]
    %v100 = vld [vmem:[%s1 + $0x290] sm:$0xff]
    %v101 = vld [vmem:[%s1 + $0x298] sm:$0xff]
    %v102 = vld [vmem:[%s1 + $0x2a0] sm:$0xff]
    %v103 = vld [vmem:[%s1 + $0x2a8] sm:$0xff]
    %v104 = vld [vmem:[%s1 + $0x2b0] sm:$0xff]
    %v105 = vld [vmem:[%s1 + $0x2b8] sm:$0xff]
    %v106 = vld [vmem:[%s1 + $0x2c0] sm:$0xff]
    %v107 = vld [vmem:[%s1 + $0x2c8] sm:$0xff]
    %v108 = vld [vmem:[%s1 + $0x2d0] sm:$0xff]
    %v109 = vld [vmem:[%s1 + $0x2d8] sm:$0xff]
    %v110 = vld [vmem:[%s1 + $0x2e0] sm:$0xff]
    %v111 = vld [vmem:[%s1 + $0x2e8] sm:$0xff]
    %v112 = vld [vmem:[%s1 + $0x2f0] sm:$0xff]
    %v113 = vld [vmem:[%s1 + $0x2f8] sm:$0xff]
    %v114 = vld [vmem:[%s1 + $0x300] sm:$0xff]
    %v115 = vld [vmem:[%s1 + $0x308] sm:$0xff]
    %v116 = vld [vmem:[%s1 + $0x310] sm:$0xff]
    %v117 = vld [vmem:[%s1 + $0x318] sm:$0xff]
    %v118 = vld [vmem:[%s1 + $0x320] sm:$0xff]
    %v119 = vld [vmem:[%s1 + $0x328] sm:$0xff]
    %v120 = vld [vmem:[%s1 + $0x330] sm:$0xff]
    %v121 = vld [vmem:[%s1 + $0x338] sm:$0xff]
    %v122 = vld [vmem:[%s1 + $0x340] sm:$0xff]
    %v123 = vld [vmem:[%s1 + $0x348] sm:$0xff]
    %v124 = vld [vmem:[%s1 + $0x350] sm:$0xff]
    %v125 = vld [vmem:[%s1 + $0x358] sm:$0xff]
    %v126 = vld [vmem:[%s1 + $0x360] sm:$0xff]
    %v127 = vld [vmem:[%s1 + $0x368] sm:$0xff]
    %v128 = vld [vmem:[%s1 + $0x370] sm:$0xff]
    %v129 = vld [vmem:[%s1 + $0x378] sm:$0xff]
    %v130 = vld [vmem:[%s1 + $0x380] sm:$0xff]
    %v131 = vld [vmem:[%s1 + $0x388] sm:$0xff]
    %v132 = vld [vmem:[%s1 + $0x390] sm:$0xff]
    %v133 = vld [vmem:[%s1 + $0x398] sm:$0xff]
    %v134 = vld [vmem:[%s1 + $0x3a0] sm:$0xff]
    %v135 = vld [vmem:[%s1 + $0x3a8] sm:$0xff]
    %v136 = vld [vmem:[%s1 + $0x3b0] sm:$0xff]
    %v137 = vld [vmem:[%s1 + $0x3b8] sm:$0xff]
    %v138 = vld [vmem:[%s1 + $0x3c0] sm:$0xff]
    %v139 = vld [vmem:[%s1 + $0x3c8] sm:$0xff]
    %v140 = vld [vmem:[%s1 + $0x3d0] sm:$0xff]
    %v141 = vld [vmem:[%s1 + $0x3d8] sm:$0xff]
    %v142 = vld [vmem:[%s1 + $0x3e0] sm:$0xff]
    %v143 = vld [vmem:[%s1 + $0x3e8] sm:$0xff]
    %v144 = vld [vmem:[%s1 + $0x3f0] sm:$0xff]
    %v145 = vld [vmem:[%s1 + $0x3f8] sm:$0xff]
    %v146 = vld [vmem:[%s1 + $0x400] sm:$0xff]
    %v147 = vld [vmem:[%s1 + $0x408] sm:$0xff]
    %v148 = vld [vmem:[%s1 + $0x410] sm:$0xff]
    %v149 = vld [vmem:[%s1 + $0x418] sm:$0xff]
    %v150 = vld [vmem:[%s1 + $0x420] sm:$0xff]
    %v151 = vld [vmem:[%s1 + $0x428] sm:$0xff]
    %v152 = vld [vmem:[%s1 + $0x430] sm:$0xff]
    %v153 = vld [vmem:[%s1 + $0x438] sm:$0xff]
    %v154 = vld [vmem:[%s1 + $0x440] sm:$0xff]
    %v155 = vld [vmem:[%s1 + $0x448] sm:$0xff]
    %v156 = vld [vmem:[%s1 + $0x450] sm:$0xff]
    %v157 = vld [vmem:[%s1 + $0x458] sm:$0xff]
    %v158 = vld [vmem:[%s1 + $0x460] sm:$0xff]
    %v159 = vld [vmem:[%s1 + $0x468] sm:$0xff]
    %v160 = vld [vmem:[%s1 + $0x470] sm:$0xff]
    %v161 = vld [vmem:[%s1 + $0x478] sm:$0xff]
    %v162 = vld [vmem:[%s1 + $0x480] sm:$0xff]
    %v163 = vld [vmem:[%s1 + $0x488] sm:$0xff]
    %v164 = vld [vmem:[%s1 + $0x490] sm:$0xff]
    %v165 = vld [vmem:[%s1 + $0x498] sm:$0xff]
    %v166 = vld [vmem:[%s1 + $0x4a0] sm:$0xff]
    %v167 = vld [vmem:[%s1 + $0x4a8] sm:$0xff]
    %v168 = vld [vmem:[%s1 + $0x4b0] sm:$0xff]
    %v169 = vld [vmem:[%s1 + $0x4b8] sm:$0xff]
    %v170 = vld [vmem:[%s1 + $0x4c0] sm:$0xff]
    %v171 = vld [vmem:[%s1 + $0x4c8] sm:$0xff]
    %v172 = vld [vmem:[%s1 + $0x4d0] sm:$0xff]
    %v173 = vld [vmem:[%s1 + $0x4d8] sm:$0xff]
    %v174 = vld [vmem:[%s1 + $0x4e0] sm:$0xff]
    %v175 = vld [vmem:[%s1 + $0x4e8] sm:$0xff]
    %v176 = vld [vmem:[%s1 + $0x4f0] sm:$0xff]
    %v177 = vld [vmem:[%s1 + $0x4f8] sm:$0xff]
    %v178 = vld [vmem:[%s1 + $0x500] sm:$0xff]
    %v179 = vld [vmem:[%s1 + $0x508] sm:$0xff]
    %v180 = vld [vmem:[%s1 + $0x510] sm:$0xff]
    %v181 = vld [vmem:[%s1 + $0x518] sm:$0xff]
    %v182 = vld [vmem:[%s1 + $0x520] sm:$0xff]
    %v183 = vld [vmem:[%s1 + $0x528] sm:$0xff]
    %v184 = vld [vmem:[%s1 + $0x530] sm:$0xff]
    %v185 = vld [vmem:[%s1 + $0x538] sm:$0xff]
    %v186 = vld [vmem:[%s1 + $0x540] sm:$0xff]
    %v187 = vld [vmem:[%s1 + $0x548] sm:$0xff]
    %v188 = vld [vmem:[%s1 + $0x550] sm:$0xff]
    %v189 = vld [vmem:[%s1 + $0x558] sm:$0xff]
    %v190 = vld [vmem:[%s1 + $0x560] sm:$0xff]
    %v191 = vld [vmem:[%s1 + $0x568] sm:$0xff]
    %v192 = vld [vmem:[%s1 + $0x570] sm:$0xff]
    %v193 = vld [vmem:[%s1 + $0x578] sm:$0xff]
    %v194 = vld [vmem:[%s1 + $0x580] sm:$0xff]
    %v195 = vld [vmem:[%s1 + $0x588] sm:$0xff]
    %v196 = vld [vmem:[%s1 + $0x590] sm:$0xff]
    %v197 = vld [vmem:[%s1 + $0x598] sm:$0xff]
    %v198 = vld [vmem:[%s1 + $0x5a0] sm:$0xff]
    %v199 = vld [vmem:[%s1 + $0x5a8] sm:$0xff]
    %v200 = vld [vmem:[%s1 + $0x5b0] sm:$0xff]
    %v201 = vld [vmem:[%s1 + $0x5b8] sm:$0xff]
    %v202 = vld [vmem:[%s1 + $0x5c0] sm:$0xff]
    %v203 = vld [vmem:[%s1 + $0x5c8] sm:$0xff]
    %v204 = vld [vmem:[%s1 + $0x5d0] sm:$0xff]
    %v205 = vld [vmem:[%s1 + $0x5d8] sm:$0xff]
    %v206 = vld [vmem:[%s1 + $0x5e0] sm:$0xff]
    %v207 = vld [vmem:[%s1 + $0x5e8] sm:$0xff]
    %v208 = vld [vmem:[%s1 + $0x5f0] sm:$0xff]
    %v209 = vld [vmem:[%s1 + $0x5f8] sm:$0xff]
    %v210 = vld [vmem:[%s1 + $0x600] sm:$0xff]
    %v211 = vld [vmem:[%s1 + $0x608] sm:$0xff]
    %v212 = vld [vmem:[%s1 + $0x610] sm:$0xff]
    %v213 = vld [vmem:[%s1 + $0x618] sm:$0xff]
    %v214 = vld [vmem:[%s1 + $0x620] sm:$0xff]
    %v215 = vld [vmem:[%s1 + $0x628] sm:$0xff]
    %v216 = vld [vmem:[%s1 + $0x630] sm:$0xff]
    %v217 = vld [vmem:[%s1 + $0x638] sm:$0xff]
    %v218 = vld [vmem:[%s1 + $0x640] sm:$0xff]
    %v219 = vld [vmem:[%s1 + $0x648] sm:$0xff]
    %v220 = vld [vmem:[%s1 + $0x650] sm:$0xff]
    %v221 = vld [vmem:[%s1 + $0x658] sm:$0xff]
    %v222 = vld [vmem:[%s1 + $0x660] sm:$0xff]
    %v223 = vld [vmem:[%s1 + $0x668] sm:$0xff]
    %v224 = vld [vmem:[%s1 + $0x670] sm:$0xff]
    %v225 = vld [vmem:[%s1 + $0x678] sm:$0xff]
    %v226 = vld [vmem:[%s1 + $0x680] sm:$0xff]
    %v227 = vld [vmem:[%s1 + $0x688] sm:$0xff]
    %v228 = vld [vmem:[%s1 + $0x690] sm:$0xff]
    %v229 = vld [vmem:[%s1 + $0x698] sm:$0xff]
    %v230 = vld [vmem:[%s1 + $0x6a0] sm:$0xff]
    %v231 = vld [vmem:[%s1 + $0x6a8] sm:$0xff]
    %v232 = vld [vmem:[%s1 + $0x6b0] sm:$0xff]
    %v233 = vld [vmem:[%s1 + $0x6b8] sm:$0xff]
    %v234 = vld [vmem:[%s1 + $0x6c0] sm:$0xff]
    %v235 = vld [vmem:[%s1 + $0x6c8] sm:$0xff]
    %v236 = vld [vmem:[%s1 + $0x6d0] sm:$0xff]
    %v237 = vld [vmem:[%s1 + $0x6d8] sm:$0xff]
    %v238 = vld [vmem:[%s1 + $0x6e0] sm:$0xff]
    %v239 = vld [vmem:[%s1 + $0x6e8] sm:$0xff]
    %v240 = vld [vmem:[%s1 + $0x6f0] sm:$0xff]
    %v241 = vld [vmem:[%s1 + $0x6f8] sm:$0xff]
    %v242 = vld [vmem:[%s1 + $0x700] sm:$0xff]
    %v243 = vld [vmem:[%s1 + $0x708] sm:$0xff]
    %v244 = vld [vmem:[%s1 + $0x710] sm:$0xff]
    %v245 = vld [vmem:[%s1 + $0x718] sm:$0xff]
    %v246 = vld [vmem:[%s1 + $0x720] sm:$0xff]
    %v247 = vld [vmem:[%s1 + $0x728] sm:$0xff]
    %v248 = vld [vmem:[%s1 + $0x730] sm:$0xff]
    %v249 = vld [vmem:[%s1 + $0x738] sm:$0xff]
    %v250 = vld [vmem:[%s1 + $0x740] sm:$0xff]
    %v251 = vld [vmem:[%s1 + $0x748] sm:$0xff]
    %v252 = vld [vmem:[%s1 + $0x750] sm:$0xff]
    %v253 = vld [vmem:[%s1 + $0x758] sm:$0xff]
    %v254 = vld [vmem:[%s1 + $0x760] sm:$0xff]
    %v255 = vld [vmem:[%s1 + $0x768] sm:$0xff]
    %v256 = vld [vmem:[%s1 + $0x770] sm:$0xff]
    %v257 = vld [vmem:[%s1 + $0x778] sm:$0xff]
    %v258 = vld [vmem:[%s1 + $0x780] sm:$0xff]
    %v259 = vld [vmem:[%s1 + $0x788] sm:$0xff]
    %v260 = vld [vmem:[%s1 + $0x790] sm:$0xff]
    %v261 = vld [vmem:[%s1 + $0x798] sm:$0xff]
    %v262 = vld [vmem:[%s1 + $0x7a0] sm:$0xff]
    %v263 = vld [vmem:[%s1 + $0x7a8] sm:$0xff]
    %v264 = vld [vmem:[%s1 + $0x7b0] sm:$0xff]
    %v265 = vld [vmem:[%s1 + $0x7b8] sm:$0xff]
    %v266 = vld [vmem:[%s1 + $0x7c0] sm:$0xff]
    %v267 = vld [vmem:[%s1 + $0x7c8] sm:$0xff]
    %v268 = vld [vmem:[%s1 + $0x7d0] sm:$0xff]
    %v269 = vld [vmem:[%s1 + $0x7d8] sm:$0xff]
    %v270 = vld [vmem:[%s1 + $0x7e0] sm:$0xff]
    %v271 = vld [vmem:[%s1 + $0x7e8] sm:$0xff]
    %v272 = vld [vmem:[%s1 + $0x7f0] sm:$0xff]
    %v273 = vld [vmem:[%s1 + $0x7f8] sm:$0xff]
    %v274 = vld [vmem:[%s1 + $0x800] sm:$0xff]
    %v275 = vld [vmem:[%s1 + $0x808] sm:$0xff]
    %v276 = vld [vmem:[%s1 + $0x810] sm:$0xff]
    %v277 = vld [vmem:[%s1 + $0x818] sm:$0xff]
    %v278 = vld [vmem:[%s1 + $0x820] sm:$0xff]
    %v279 = vld [vmem:[%s1 + $0x828] sm:$0xff]
    %v280 = vld [vmem:[%s1 + $0x830] sm:$0xff]
    %v281 = vld [vmem:[%s1 + $0x838] sm:$0xff]
    %v282 = vld [vmem:[%s1 + $0x840] sm:$0xff]
    %v283 = vld [vmem:[%s1 + $0x848] sm:$0xff]
    %v284 = vld [vmem:[%s1 + $0x850] sm:$0xff]
    %v285 = vld [vmem:[%s1 + $0x858] sm:$0xff]
    %v286 = vld [vmem:[%s1 + $0x860] sm:$0xff]
    %v287 = vld [vmem:[%s1 + $0x868] sm:$0xff]
    %v288 = vld [vmem:[%s1 + $0x870] sm:$0xff]
    %v289 = vld [vmem:[%s1 + $0x878] sm:$0xff]
    %v290 = vld [vmem:[%s1 + $0x880] sm:$0xff]
    %v291 = vld [vmem:[%s1 + $0x888] sm:$0xff]
    %v292 = vld [vmem:[%s1 + $0x890] sm:$0xff]
    %v293 = vld [vmem:[%s1 + $0x898] sm:$0xff]
    %v294 = vld [vmem:[%s1 + $0x8a0] sm:$0xff]
    %v295 = vld [vmem:[%s1 + $0x8a8] sm:$0xff]
    %v296 = vld [vmem:[%s1 + $0x8b0] sm:$0xff]
    %v297 = vld [vmem:[%s1 + $0x8b8] sm:$0xff]
    %v298 = vld [vmem:[%s1 + $0x8c0] sm:$0xff]
    %v299 = vld [vmem:[%s1 + $0x8c8] sm:$0xff]
    %v300 = vld [vmem:[%s1 + $0x8d0] sm:$0xff]
    %v301 = vld [vmem:[%s1 + $0x8d8] sm:$0xff]
    %v302 = vld [vmem:[%s1 + $0x8e0] sm:$0xff]
    %v303 = vld [vmem:[%s1 + $0x8e8] sm:$0xff]
    %v304 = vld [vmem:[%s1 + $0x8f0] sm:$0xff]
    %v305 = vld [vmem:[%s1 + $0x8f8] sm:$0xff]
    %v306 = vld [vmem:[%s2] sm:$0x1]
    %v310 = vperm.slane %v15, 0
    %v311 = vperm.slane %v15, 1
    %v312 = vperm.slane %v15, 2
    %v313 = vperm.slane %v15, 3
    %v314 = vperm.slane %v15, 4
    %v315 = vperm.slane %v15, 5
    %v316 = vperm.slane %v15, 6
    %v317 = vperm.slane %v15, 7
    %v318 = vperm.slane %v16, 0
    %v319 = vperm.slane %v16, 1
    %v320 = vperm.slane %v16, 2
    %v321 = vperm.slane %v16, 3
    %v322 = vperm.slane %v16, 4
    %v323 = vperm.slane %v16, 5
    %v324 = vperm.slane %v16, 6
    %v325 = vperm.slane %v16, 7
    %v326 = vperm.slane %v17, 0
    %v327 = vperm.slane %v17, 1
    %346 = vmatpush.msra.mxu0 %v33
    %347 = vmatpush.msra.mxu0 %v32
    %348 = vmatpush.msra.mxu0 %v31
    %349 = vmatpush.msra.mxu0 %v30
    %350 = vmatpush.msra.mxu0 %v29
    %351 = vmatpush.msra.mxu0 %v28
    %352 = vmatpush.msra.mxu0 %v27
    %353 = vmatpush.msra.mxu0 %v26
    %354 = vmatpush.msra.mxu0 %v25
    %355 = vmatpush.msra.mxu0 %v24
    %356 = vmatpush.msra.mxu0 %v23
    %357 = vmatpush.msra.mxu0 %v22
    %358 = vmatpush.msra.mxu0 %v21
    %359 = vmatpush.msra.mxu0 %v20
    %360 = vmatpush.msra.mxu0 %v19
    %361 = vmatpush.msra.mxu0 %v18
    %362 = vmatmul.f32.gmra.mxu0 %v310
    %v363 = vpop.f32.mrf.mxu0
    %v364 = vadd.f32 %v306, %v363
    %365 = vdwg.mxu0
    %366 = vmatpush.msra.mxu0 %v49
    %367 = vmatpush.msra.mxu0 %v48
    %368 = vmatpush.msra.mxu0 %v47
    %369 = vmatpush.msra.mxu0 %v46
    %370 = vmatpush.msra.mxu0 %v45
    %371 = vmatpush.msra.mxu0 %v44
    %372 = vmatpush.msra.mxu0 %v43
    %373 = vmatpush.msra.mxu0 %v42
    %374 = vmatpush.msra.mxu0 %v41
    %375 = vmatpush.msra.mxu0 %v40
    %376 = vmatpush.msra.mxu0 %v39
    %377 = vmatpush.msra.mxu0 %v38
    %378 = vmatpush.msra.mxu0 %v37
    %379 = vmatpush.msra.mxu0 %v36
    %380 = vmatpush.msra.mxu0 %v35
    %381 = vmatpush.msra.mxu0 %v34
    %382 = vmatmul.f32.gmra.mxu0 %v311
    %v383 = vpop.f32.mrf.mxu0
    %v384 = vadd.f32 %v364, %v383
    %385 = vdwg.mxu0
    %386 = vmatpush.msra.mxu0 %v65
    %387 = vmatpush.msra.mxu0 %v64
    %388 = vmatpush.msra.mxu0 %v63
    %389 = vmatpush.msra.mxu0 %v62
    %390 = vmatpush.msra.mxu0 %v61
    %391 = vmatpush.msra.mxu0 %v60
    %392 = vmatpush.msra.mxu0 %v59
    %393 = vmatpush.msra.mxu0 %v58
    %394 = vmatpush.msra.mxu0 %v57
    %395 = vmatpush.msra.mxu0 %v56
    %396 = vmatpush.msra.mxu0 %v55
    %397 = vmatpush.msra.mxu0 %v54
    %398 = vmatpush.msra.mxu0 %v53
    %399 = vmatpush.msra.mxu0 %v52
    %400 = vmatpush.msra.mxu0 %v51
    %401 = vmatpush.msra.mxu0 %v50
    %402 = vmatmul.f32.gmra.mxu0 %v312
    %v403 = vpop.f32.mrf.mxu0
    %v404 = vadd.f32 %v384, %v403
    %405 = vdwg.mxu0
    %406 = vmatpush.msra.mxu0 %v81
    %407 = vmatpush.msra.mxu0 %v80
    %408 = vmatpush.msra.mxu0 %v79
    %409 = vmatpush.msra.mxu0 %v78
    %410 = vmatpush.msra.mxu0 %v77
    %411 = vmatpush.msra.mxu0 %v76
    %412 = vmatpush.msra.mxu0 %v75
    %413 = vmatpush.msra.mxu0 %v74
    %414 = vmatpush.msra.mxu0 %v73
    %415 = vmatpush.msra.mxu0 %v72
    %416 = vmatpush.msra.mxu0 %v71
    %417 = vmatpush.msra.mxu0 %v70
    %418 = vmatpush.msra.mxu0 %v69
    %419 = vmatpush.msra.mxu0 %v68
    %420 = vmatpush.msra.mxu0 %v67
    %421 = vmatpush.msra.mxu0 %v66
    %422 = vmatmul.f32.gmra.mxu0 %v313
    %v423 = vpop.f32.mrf.mxu0
    %v424 = vadd.f32 %v404, %v423
    %425 = vdwg.mxu0
    %426 = vmatpush.msra.mxu0 %v97
    %427 = vmatpush.msra.mxu0 %v96
    %428 = vmatpush.msra.mxu0 %v95
    %429 = vmatpush.msra.mxu0 %v94
    %430 = vmatpush.msra.mxu0 %v93
    %431 = vmatpush.msra.mxu0 %v92
    %432 = vmatpush.msra.mxu0 %v91
    %433 = vmatpush.msra.mxu0 %v90
    %434 = vmatpush.msra.mxu0 %v89
    %435 = vmatpush.msra.mxu0 %v88
    %436 = vmatpush.msra.mxu0 %v87
    %437 = vmatpush.msra.mxu0 %v86
    %438 = vmatpush.msra.mxu0 %v85
    %439 = vmatpush.msra.mxu0 %v84
    %440 = vmatpush.msra.mxu0 %v83
    %441 = vmatpush.msra.mxu0 %v82
    %442 = vmatmul.f32.gmra.mxu0 %v314
    %v443 = vpop.f32.mrf.mxu0
    %v444 = vadd.f32 %v424, %v443
    %445 = vdwg.mxu0
    %446 = vmatpush.msra.mxu0 %v113
    %447 = vmatpush.msra.mxu0 %v112
    %448 = vmatpush.msra.mxu0 %v111
    %449 = vmatpush.msra.mxu0 %v110
    %450 = vmatpush.msra.mxu0 %v109
    %451 = vmatpush.msra.mxu0 %v108
    %452 = vmatpush.msra.mxu0 %v107
    %453 = vmatpush.msra.mxu0 %v106
    %454 = vmatpush.msra.mxu0 %v105
    %455 = vmatpush.msra.mxu0 %v104
    %456 = vmatpush.msra.mxu0 %v103
    %457 = vmatpush.msra.mxu0 %v102
    %458 = vmatpush.msra.mxu0 %v101
    %459 = vmatpush.msra.mxu0 %v100
    %460 = vmatpush.msra.mxu0 %v99
    %461 = vmatpush.msra.mxu0 %v98
    %462 = vmatmul.f32.gmra.mxu0 %v315
    %v463 = vpop.f32.mrf.mxu0
    %v464 = vadd.f32 %v444, %v463
    %465 = vdwg.mxu0
    %466 = vmatpush.msra.mxu0 %v129
    %467 = vmatpush.msra.mxu0 %v128
    %468 = vmatpush.msra.mxu0 %v127
    %469 = vmatpush.msra.mxu0 %v126
    %470 = vmatpush.msra.mxu0 %v125
    %471 = vmatpush.msra.mxu0 %v124
    %472 = vmatpush.msra.mxu0 %v123
    %473 = vmatpush.msra.mxu0 %v122
    %474 = vmatpush.msra.mxu0 %v121
    %475 = vmatpush.msra.mxu0 %v120
    %476 = vmatpush.msra.mxu0 %v119
    %477 = vmatpush.msra.mxu0 %v118
    %478 = vmatpush.msra.mxu0 %v117
    %479 = vmatpush.msra.mxu0 %v116
    %480 = vmatpush.msra.mxu0 %v115
    %481 = vmatpush.msra.mxu0 %v114
    %482 = vmatmul.f32.gmra.mxu0 %v316
    %v483 = vpop.f32.mrf.mxu0
    %v484 = vadd.f32 %v464, %v483
    %485 = vdwg.mxu0
    %486 = vmatpush.msra.mxu0 %v145
    %487 = vmatpush.msra.mxu0 %v144
    %488 = vmatpush.msra.mxu0 %v143
    %489 = vmatpush.msra.mxu0 %v142
    %490 = vmatpush.msra.mxu0 %v141
    %491 = vmatpush.msra.mxu0 %v140
    %492 = vmatpush.msra.mxu0 %v139
    %493 = vmatpush.msra.mxu0 %v138
    %494 = vmatpush.msra.mxu0 %v137
    %495 = vmatpush.msra.mxu0 %v136
    %496 = vmatpush.msra.mxu0 %v135
    %497 = vmatpush.msra.mxu0 %v134
    %498 = vmatpush.msra.mxu0 %v133
    %499 = vmatpush.msra.mxu0 %v132
    %500 = vmatpush.msra.mxu0 %v131
    %501 = vmatpush.msra.mxu0 %v130
    %502 = vmatmul.f32.gmra.mxu0 %v317
    %v503 = vpop.f32.mrf.mxu0
    %v504 = vadd.f32 %v484, %v503
    %505 = vdwg.mxu0
    %506 = vmatpush.msra.mxu0 %v161
    %507 = vmatpush.msra.mxu0 %v160
    %508 = vmatpush.msra.mxu0 %v159
    %509 = vmatpush.msra.mxu0 %v158
    %510 = vmatpush.msra.mxu0 %v157
    %511 = vmatpush.msra.mxu0 %v156
    %512 = vmatpush.msra.mxu0 %v155
    %513 = vmatpush.msra.mxu0 %v154
    %514 = vmatpush.msra.mxu0 %v153
    %515 = vmatpush.msra.mxu0 %v152
    %516 = vmatpush.msra.mxu0 %v151
    %517 = vmatpush.msra.mxu0 %v150
    %518 = vmatpush.msra.mxu0 %v149
    %519 = vmatpush.msra.mxu0 %v148
    %520 = vmatpush.msra.mxu0 %v147
    %521 = vmatpush.msra.mxu0 %v146
    %522 = vmatmul.f32.gmra.mxu0 %v318
    %v523 = vpop.f32.mrf.mxu0
    %v524 = vadd.f32 %v504, %v523
    %525 = vdwg.mxu0
    %526 = vmatpush.msra.mxu0 %v177
    %527 = vmatpush.msra.mxu0 %v176
    %528 = vmatpush.msra.mxu0 %v175
    %529 = vmatpush.msra.mxu0 %v174
    %530 = vmatpush.msra.mxu0 %v173
    %531 = vmatpush.msra.mxu0 %v172
    %532 = vmatpush.msra.mxu0 %v171
    %533 = vmatpush.msra.mxu0 %v170
    %534 = vmatpush.msra.mxu0 %v169
    %535 = vmatpush.msra.mxu0 %v168
    %536 = vmatpush.msra.mxu0 %v167
    %537 = vmatpush.msra.mxu0 %v166
    %538 = vmatpush.msra.mxu0 %v165
    %539 = vmatpush.msra.mxu0 %v164
    %540 = vmatpush.msra.mxu0 %v163
    %541 = vmatpush.msra.mxu0 %v162
    %542 = vmatmul.f32.gmra.mxu0 %v319
    %v543 = vpop.f32.mrf.mxu0
    %v544 = vadd.f32 %v524, %v543
    %545 = vdwg.mxu0
    %546 = vmatpush.msra.mxu0 %v193
    %547 = vmatpush.msra.mxu0 %v192
    %548 = vmatpush.msra.mxu0 %v191
    %549 = vmatpush.msra.mxu0 %v190
    %550 = vmatpush.msra.mxu0 %v189
    %551 = vmatpush.msra.mxu0 %v188
    %552 = vmatpush.msra.mxu0 %v187
    %553 = vmatpush.msra.mxu0 %v186
    %554 = vmatpush.msra.mxu0 %v185
    %555 = vmatpush.msra.mxu0 %v184
    %556 = vmatpush.msra.mxu0 %v183
    %557 = vmatpush.msra.mxu0 %v182
    %558 = vmatpush.msra.mxu0 %v181
    %559 = vmatpush.msra.mxu0 %v180
    %560 = vmatpush.msra.mxu0 %v179
    %561 = vmatpush.msra.mxu0 %v178
    %562 = vmatmul.f32.gmra.mxu0 %v320
    %v563 = vpop.f32.mrf.mxu0
    %v564 = vadd.f32 %v544, %v563
    %565 = vdwg.mxu0
    %566 = vmatpush.msra.mxu0 %v209
    %567 = vmatpush.msra.mxu0 %v208
    %568 = vmatpush.msra.mxu0 %v207
    %569 = vmatpush.msra.mxu0 %v206
    %570 = vmatpush.msra.mxu0 %v205
    %571 = vmatpush.msra.mxu0 %v204
    %572 = vmatpush.msra.mxu0 %v203
    %573 = vmatpush.msra.mxu0 %v202
    %574 = vmatpush.msra.mxu0 %v201
    %575 = vmatpush.msra.mxu0 %v200
    %576 = vmatpush.msra.mxu0 %v199
    %577 = vmatpush.msra.mxu0 %v198
    %578 = vmatpush.msra.mxu0 %v197
    %579 = vmatpush.msra.mxu0 %v196
    %580 = vmatpush.msra.mxu0 %v195
    %581 = vmatpush.msra.mxu0 %v194
    %582 = vmatmul.f32.gmra.mxu0 %v321
    %v583 = vpop.f32.mrf.mxu0
    %v584 = vadd.f32 %v564, %v583
    %585 = vdwg.mxu0
    %586 = vmatpush.msra.mxu0 %v225
    %587 = vmatpush.msra.mxu0 %v224
    %588 = vmatpush.msra.mxu0 %v223
    %589 = vmatpush.msra.mxu0 %v222
    %590 = vmatpush.msra.mxu0 %v221
    %591 = vmatpush.msra.mxu0 %v220
    %592 = vmatpush.msra.mxu0 %v219
    %593 = vmatpush.msra.mxu0 %v218
    %594 = vmatpush.msra.mxu0 %v217
    %595 = vmatpush.msra.mxu0 %v216
    %596 = vmatpush.msra.mxu0 %v215
    %597 = vmatpush.msra.mxu0 %v214
    %598 = vmatpush.msra.mxu0 %v213
    %599 = vmatpush.msra.mxu0 %v212
    %600 = vmatpush.msra.mxu0 %v211
    %601 = vmatpush.msra.mxu0 %v210
    %602 = vmatmul.f32.gmra.mxu0 %v322
    %v603 = vpop.f32.mrf.mxu0
    %v604 = vadd.f32 %v584, %v603
    %605 = vdwg.mxu0
    %606 = vmatpush.msra.mxu0 %v241
    %607 = vmatpush.msra.mxu0 %v240
    %608 = vmatpush.msra.mxu0 %v239
    %609 = vmatpush.msra.mxu0 %v238
    %610 = vmatpush.msra.mxu0 %v237
    %611 = vmatpush.msra.mxu0 %v236
    %612 = vmatpush.msra.mxu0 %v235
    %613 = vmatpush.msra.mxu0 %v234
    %614 = vmatpush.msra.mxu0 %v233
    %615 = vmatpush.msra.mxu0 %v232
    %616 = vmatpush.msra.mxu0 %v231
    %617 = vmatpush.msra.mxu0 %v230
    %618 = vmatpush.msra.mxu0 %v229
    %619 = vmatpush.msra.mxu0 %v228
    %620 = vmatpush.msra.mxu0 %v227
    %621 = vmatpush.msra.mxu0 %v226
    %622 = vmatmul.f32.gmra.mxu0 %v323
    %v623 = vpop.f32.mrf.mxu0
    %v624 = vadd.f32 %v604, %v623
    %625 = vdwg.mxu0
    %626 = vmatpush.msra.mxu0 %v257
    %627 = vmatpush.msra.mxu0 %v256
    %628 = vmatpush.msra.mxu0 %v255
    %629 = vmatpush.msra.mxu0 %v254
    %630 = vmatpush.msra.mxu0 %v253
    %631 = vmatpush.msra.mxu0 %v252
    %632 = vmatpush.msra.mxu0 %v251
    %633 = vmatpush.msra.mxu0 %v250
    %634 = vmatpush.msra.mxu0 %v249
    %635 = vmatpush.msra.mxu0 %v248
    %636 = vmatpush.msra.mxu0 %v247
    %637 = vmatpush.msra.mxu0 %v246
    %638 = vmatpush.msra.mxu0 %v245
    %639 = vmatpush.msra.mxu0 %v244
    %640 = vmatpush.msra.mxu0 %v243
    %641 = vmatpush.msra.mxu0 %v242
    %642 = vmatmul.f32.gmra.mxu0 %v324
    %v643 = vpop.f32.mrf.mxu0
    %v644 = vadd.f32 %v624, %v643
    %645 = vdwg.mxu0
    %646 = vmatpush.msra.mxu0 %v273
    %647 = vmatpush.msra.mxu0 %v272
    %648 = vmatpush.msra.mxu0 %v271
    %649 = vmatpush.msra.mxu0 %v270
    %650 = vmatpush.msra.mxu0 %v269
    %651 = vmatpush.msra.mxu0 %v268
    %652 = vmatpush.msra.mxu0 %v267
    %653 = vmatpush.msra.mxu0 %v266
    %654 = vmatpush.msra.mxu0 %v265
    %655 = vmatpush.msra.mxu0 %v264
    %656 = vmatpush.msra.mxu0 %v263
    %657 = vmatpush.msra.mxu0 %v262
    %658 = vmatpush.msra.mxu0 %v261
    %659 = vmatpush.msra.mxu0 %v260
    %660 = vmatpush.msra.mxu0 %v259
    %661 = vmatpush.msra.mxu0 %v258
    %662 = vmatmul.f32.gmra.mxu0 %v325
    %v663 = vpop.f32.mrf.mxu0
    %v664 = vadd.f32 %v644, %v663
    %665 = vdwg.mxu0
    %666 = vmatpush.msra.mxu0 %v289
    %667 = vmatpush.msra.mxu0 %v288
    %668 = vmatpush.msra.mxu0 %v287
    %669 = vmatpush.msra.mxu0 %v286
    %670 = vmatpush.msra.mxu0 %v285
    %671 = vmatpush.msra.mxu0 %v284
    %672 = vmatpush.msra.mxu0 %v283
    %673 = vmatpush.msra.mxu0 %v282
    %674 = vmatpush.msra.mxu0 %v281
    %675 = vmatpush.msra.mxu0 %v280
    %676 = vmatpush.msra.mxu0 %v279
    %677 = vmatpush.msra.mxu0 %v278
    %678 = vmatpush.msra.mxu0 %v277
    %679 = vmatpush.msra.mxu0 %v276
    %680 = vmatpush.msra.mxu0 %v275
    %681 = vmatpush.msra.mxu0 %v274
    %682 = vmatmul.f32.gmra.mxu0 %v326
    %v683 = vpop.f32.mrf.mxu0
    %v684 = vadd.f32 %v664, %v683
    %685 = vdwg.mxu0
    %686 = vmatpush.msra.mxu0 %v305
    %687 = vmatpush.msra.mxu0 %v304
    %688 = vmatpush.msra.mxu0 %v303
    %689 = vmatpush.msra.mxu0 %v302
    %690 = vmatpush.msra.mxu0 %v301
    %691 = vmatpush.msra.mxu0 %v300
    %692 = vmatpush.msra.mxu0 %v299
    %693 = vmatpush.msra.mxu0 %v298
    %694 = vmatpush.msra.mxu0 %v297
    %695 = vmatpush.msra.mxu0 %v296
    %696 = vmatpush.msra.mxu0 %v295
    %697 = vmatpush.msra.mxu0 %v294
    %698 = vmatpush.msra.mxu0 %v293
    %699 = vmatpush.msra.mxu0 %v292
    %700 = vmatpush.msra.mxu0 %v291
    %701 = vmatpush.msra.mxu0 %v290
    %702 = vmatmul.f32.gmra.mxu0 %v327
    %v703 = vpop.f32.mrf.mxu0
    %v704 = vadd.f32 %v684, %v703
    %705 = vdwg.mxu0
    %vm706 = vcmask 778240
    %707 = vst.msk [vmem:[#allocation2] sm:$0x1] %vm706, %v704
    // Predicated region
    $region14: #{conv2d_1x1.1} parent=1 // pred_check
      _
    $region15: #{conv2d_1x1.1} parent=1 // pred_check_branch
      %709 = sbr.rel (0) target = $region17
    $region16: #{conv2d_1x1.1} parent=1 // pred_region
      %711 = vsyncadd [#allocation3], 0
      %s713 = sshll.u32 [#allocation2], 4
      %s714 = int_to_ptr.vmem [resolvable:$true] %s713
      %s715 = sshll.u32 %s3, 4
      %s716 = int_to_ptr.hbm [resolvable:$true] %s715
      %718 = dma.vmem_to_hbm [thread:$0]  %s714, 16, %s716, [#allocation3]
    $region17: #{conv2d_1x1.1} parent=1 // pred_fallthru
      _
    // Predicated region
    $region18: #{conv2d_1x1.1} parent=1 // pred_check
      _
    $region19: #{conv2d_1x1.1} parent=1 // pred_check_branch
      %720 = sbr.rel (0) target = $region21
    $region20: #{conv2d_1x1.1} parent=1 // pred_region
      %722 = dma.done [#allocation3], 16
    $region21: #{conv2d_1x1.1} parent=1 // pred_fallthru
      _
    %723 = vsyncpa [#allocation3], 1

</llo_original>
